<compile_context>
chip_gen: v7x
topology: tpu7x:2x2x1
jax: 0.10.0
libtpu: 0.0.40
codegen_flags: <defaults>
</compile_context>

<pallas_src>
import jax
import jax.numpy as jnp
from jax.experimental import pallas as pl
from jax.experimental.pallas import tpu as pltpu

_W_CHUNK = 128  # in-kernel width chunk: bounds MXU MACs/output element


def _make_upsample_kernel(factor, w_in, w_out, is_f32, chunk):
    f = int(factor)
    rep_dtype = jnp.bfloat16  # exact for both paths (0.0 / 1.0 entries)

    def kernel(x_ref, o_ref):
        # Tile-invariant 0/1 width-replication block rep[w, o] = (o // f == w),
        # built on the VPU each step (trivial, hidden under the output DMA)
        # instead of living in VMEM as a double-buffered input.
        tw_full = min(chunk, w_in)
        row_id = jax.lax.broadcasted_iota(jnp.int32, (tw_full, tw_full * f), 0)
        col_id = jax.lax.broadcasted_iota(jnp.int32, (tw_full, tw_full * f), 1)
        d = col_id - row_id * f                       # avoids integer division
        rep_full = jnp.where((d >= 0) & (d < f), 1.0, 0.0).astype(rep_dtype)

        rep_b = rep_full if is_f32 else rep_full.astype(x_ref.dtype)

        for t0 in range(0, w_in, tw_full):            # static unroll over W chunks
            tw = min(tw_full, w_in - t0)
            rep = rep_b if tw == tw_full else rep_b[:tw, :tw * f]
            xt = x_ref[:, t0:t0 + tw]
            if is_f32:
                # Exact f32 path: 3-way bf16 split (x == hi + lo + lo2 exactly
                # for normal-range f32) + native bf16 MXU passes with f32
                # accumulation -> bit-exact copy of every input value.
                hi = xt.astype(jnp.bfloat16)
                r1 = xt - hi.astype(jnp.float32)
                lo = r1.astype(jnp.bfloat16)
                lo2 = (r1 - lo.astype(jnp.float32)).astype(jnp.bfloat16)
                xw = (jnp.dot(hi, rep, preferred_element_type=jnp.float32)
                      + jnp.dot(lo, rep, preferred_element_type=jnp.float32)
                      + jnp.dot(lo2, rep, preferred_element_type=jnp.float32))
            else:
                # bf16: one nonzero per rep column + f32 MXU accumulation keeps
                # this exact; emit the output dtype directly (no full-tile cast,
                # halves the (TR, TW*f) intermediate footprint).
                xw = jnp.dot(xt, rep, preferred_element_type=o_ref.dtype)
            xw = xw.astype(o_ref.dtype)               # no-op when dtypes match
            # Height replication for free: store the width-upsampled rows f
            # times.  Columns [j*Wf + t0*f, j*Wf + (t0+tw)*f) of output-view row
            # r hold output row f*r + j.  When Wf % 128 == 0 and t0 % 128 == 0
            # (typical feature maps) these stores are fully lane-dense; for very
            # small maps they are masked but the total bytes are tiny.
            for j in range(f):
                o_ref[:, j * w_out + t0 * f: j * w_out + (t0 + tw) * f] = xw

    return kernel


def _vmem_budget():
    """(block budget, vmem_limit_bytes) sized per TPU generation."""
    mib = 1024 * 1024
    try:
        cap = pltpu.get_tpu_info().vmem_capacity_bytes
    except Exception:
        cap = 64 * mib                     # conservative fallback (v7x per-TC)
    if cap <= 64 * mib:                    # v7x: 64 MiB / TensorCore
        return 20 * mib, 36 * mib
    return 48 * mib, 72 * mib              # v5e / v6e: 128 MiB


def _pick_row_tile(n_rows, w, f, itemsize, budget_bytes, packing):
    """Largest row tile (multiple of the dtype's sublane packing) that fits the
    VMEM budget, capped so the grid keeps a few steps for pipelining/megacore."""
    if n_rows <= packing:
        return n_rows
    # Double-buffered input + output blocks per row ...
    per_row = (w + w * f * f) * itemsize * 2
    # ... plus in-kernel per-chunk temporaries (upper bound).
    per_row += _W_CHUNK * f * 4 + 3 * _W_CHUNK * 2 + _W_CHUNK * 4
    tr = budget_bytes // per_row
    # Keep >= 8 (or at least 2) grid steps as long as each step still moves
    # ~0.5 MiB of HBM traffic (per-step overhead ~0.35us).
    hbm_per_row = (w + w * f * f) * itemsize
    floor_rows = max(packing, (512 * 1024) // hbm_per_row)
    for steps in (8, 2):
        cap = -(-n_rows // steps)          # ceil-div
        if cap >= floor_rows:
            tr = min(tr, cap)
            break
    tr = max(packing, min(tr, 2048, n_rows))
    tr -= tr % packing
    return max(tr, packing)


def upsampling_nearest2d(x, factor=2):
    """x: (N, C, H, W) float array -> (N, C, H*factor, W*factor), nearest-neighbor."""
    f = int(factor)
    if f != factor or f < 1:
        raise NotImplementedError("only positive integer scale factors supported")
    n, c, h, w = x.shape
    if f == 1:
        return x
    if x.dtype not in (jnp.dtype(jnp.float32), jnp.dtype(jnp.bfloat16)):
        # TODO(synk): integer / fp8 inputs need a copy-based (non-MXU) path.
        raise NotImplementedError(f"upsampling kernel supports f32/bf16, got {x.dtype}")

    hf, wf = h * f, w * f
    rows = n * c * h
    x2d = x.reshape(rows, w)

    itemsize = jnp.dtype(x.dtype).itemsize
    packing = 32 // itemsize                     # sublane packing: 8 f32, 16 bf16
    budget, vmem_limit = _vmem_budget()
    tr = _pick_row_tile(rows, w, f, itemsize, budget, packing)
    is_f32 = jnp.dtype(x.dtype) == jnp.dtype(jnp.float32)

    out2d = pl.pallas_call(
        _make_upsample_kernel(f, w, wf, is_f32, _W_CHUNK),
        out_shape=jax.ShapeDtypeStruct((rows, f * wf), x.dtype),
        grid=(pl.cdiv(rows, tr),),
        in_specs=[pl.BlockSpec((tr, w), lambda i: (i, 0))],        # TR input rows
        out_specs=pl.BlockSpec((tr, f * wf), lambda i: (i, 0)),    # TR*(f rows) out
        compiler_params=pltpu.CompilerParams(
            dimension_semantics=("parallel",),
            vmem_limit_bytes=vmem_limit,
        ),
    )(x2d)

    # Row-major layouts of (rows, f*wf) and (N, C, Hf, Wf) coincide -> free reshape.
    return out2d.reshape(n, c, hf, wf)


def upsampling_forward(in_data, factor=2):
    """Mirrors Upsampling.forward: returns the dict with 'x' upsampled."""
    in_data = dict(in_data)
    in_data['x'] = upsampling_nearest2d(in_data['x'], factor=factor)
    return in_data


if __name__ == "__main__":
    key = jax.random.PRNGKey(0)

    # f32 path (the dtype used by the style-transfer network): must be bit-exact.
    x = jax.random.normal(key, (2, 4, 16, 16), dtype=jnp.float32)
    out = upsampling_forward({'x': x}, factor=2)
    y = jax.block_until_ready(out['x'])
    ref = jnp.repeat(jnp.repeat(x, 2, axis=2), 2, axis=3)
    assert y.shape == (2, 4, 32, 32)
    assert jnp.array_equal(y, ref), "f32 nearest-neighbor output must be bit-exact"

    # bf16 path: native MXU pass emitting bf16 directly, also bit-exact.
    xb = x.astype(jnp.bfloat16)
    yb = jax.block_until_ready(upsampling_nearest2d(xb, factor=2))
    refb = jnp.repeat(jnp.repeat(xb, 2, axis=2), 2, axis=3)
    assert jnp.array_equal(yb, refb), "bf16 nearest-neighbor output must be bit-exact"

    print("KERNEL_OK")
</pallas_src>

<mosaic_0001>
module attributes {stable_mosaic.version = 11 : i64} {
  func.func @kernel(%arg0: i32, %arg1: memref<128x16xf32, #tpu.memory_space<vmem>>, %arg2: memref<128x64xf32, #tpu.memory_space<vmem>>) attributes {dimension_semantics = [#tpu.dimension_semantics<parallel>], iteration_bounds = array<i64: 1>, scalar_prefetch = 0 : i64, scratch_operands = 0 : i64, tpu.core_type = #tpu.core_type<tc>, window_params = [{transform_indices = @transform_0, window_bounds = array<i64: 128, 16>}, {transform_indices = @transform_1, window_bounds = array<i64: 128, 64>}]} {
    %0 = tpu.iota {dimensions = array<i32: 0>} : vector<16x32xi32>
    %1 = tpu.iota {dimensions = array<i32: 1>} : vector<16x32xi32>
    %c2_i32 = arith.constant 2 : i32
    %2 = vector.broadcast %c2_i32 : i32 to vector<16x32xi32>
    %3 = arith.muli %0, %2 : vector<16x32xi32>
    %4 = arith.subi %1, %3 : vector<16x32xi32>
    %c0_i32 = arith.constant 0 : i32
    %5 = vector.broadcast %c0_i32 : i32 to vector<16x32xi32>
    %6 = arith.cmpi sge, %4, %5 : vector<16x32xi32>
    %c2_i32_0 = arith.constant 2 : i32
    %7 = vector.broadcast %c2_i32_0 : i32 to vector<16x32xi32>
    %8 = arith.cmpi slt, %4, %7 : vector<16x32xi32>
    %9 = arith.andi %6, %8 : vector<16x32xi1>
    %cst = arith.constant 1.000000e+00 : f32
    %cst_1 = arith.constant 0.000000e+00 : f32
    %10 = vector.broadcast %cst : f32 to vector<16x32xf32>
    %11 = vector.broadcast %cst_1 : f32 to vector<16x32xf32>
    %12 = arith.select %9, %10, %11 : vector<16x32xi1>, vector<16x32xf32>
    %13 = arith.truncf %12 : vector<16x32xf32> to vector<16x32xbf16>
    %c0 = arith.constant 0 : index
    %c0_2 = arith.constant 0 : index
    %14 = vector.load %arg1[%c0, %c0_2] : memref<128x16xf32, #tpu.memory_space<vmem>>, vector<128x16xf32>
    %15 = arith.truncf %14 : vector<128x16xf32> to vector<128x16xbf16>
    %16 = arith.extf %15 : vector<128x16xbf16> to vector<128x16xf32>
    %17 = arith.subf %14, %16 : vector<128x16xf32>
    %18 = arith.truncf %17 : vector<128x16xf32> to vector<128x16xbf16>
    %19 = arith.extf %18 : vector<128x16xbf16> to vector<128x16xf32>
    %20 = arith.subf %17, %19 : vector<128x16xf32>
    %21 = arith.truncf %20 : vector<128x16xf32> to vector<128x16xbf16>
    %cst_3 = arith.constant dense<0.000000e+00> : vector<128x32xf32>
    %22 = tpu.matmul %15, %13, %cst_3 {dimension_numbers = #tpu.dot_dimension_numbers<[1], [0], [0], [1], [0, 0, 1, 1], [], []>} : vector<128x16xbf16>, vector<16x32xbf16>, vector<128x32xf32> -> vector<128x32xf32>
    %cst_4 = arith.constant dense<0.000000e+00> : vector<128x32xf32>
    %23 = tpu.matmul %18, %13, %cst_4 {dimension_numbers = #tpu.dot_dimension_numbers<[1], [0], [0], [1], [0, 0, 1, 1], [], []>} : vector<128x16xbf16>, vector<16x32xbf16>, vector<128x32xf32> -> vector<128x32xf32>
    %24 = arith.addf %22, %23 : vector<128x32xf32>
    %cst_5 = arith.constant dense<0.000000e+00> : vector<128x32xf32>
    %25 = tpu.matmul %21, %13, %cst_5 {dimension_numbers = #tpu.dot_dimension_numbers<[1], [0], [0], [1], [0, 0, 1, 1], [], []>} : vector<128x16xbf16>, vector<16x32xbf16>, vector<128x32xf32> -> vector<128x32xf32>
    %26 = arith.addf %24, %25 : vector<128x32xf32>
    %c0_6 = arith.constant 0 : index
    %c0_7 = arith.constant 0 : index
    %27 = vector.load %arg2[%c0_6, %c0_7] : memref<128x64xf32, #tpu.memory_space<vmem>>, vector<128x32xf32>
    tpu.vector_store %arg2[%c0_6, %c0_7], %26 {strides = array<i32>} : memref<128x64xf32, #tpu.memory_space<vmem>>, vector<128x32xf32>,
    %c0_8 = arith.constant 0 : index
    %c32 = arith.constant 32 : index
    %28 = vector.load %arg2[%c0_8, %c32] : memref<128x64xf32, #tpu.memory_space<vmem>>, vector<128x32xf32>
    tpu.vector_store %arg2[%c0_8, %c32], %26 {strides = array<i32>} : memref<128x64xf32, #tpu.memory_space<vmem>>, vector<128x32xf32>,
    return
  }
  func.func @transform_0(%arg0: i32) -> (i32, i32) {
    %c0_i32 = arith.constant 0 : i32
    %c0_i32_0 = arith.constant 0 : i32
    return %arg0, %c0_i32 : i32, i32
  }
  func.func @transform_1(%arg0: i32) -> (i32, i32) {
    %c0_i32 = arith.constant 0 : i32
    %c0_i32_0 = arith.constant 0 : i32
    return %arg0, %c0_i32 : i32, i32
  }
}

</mosaic_0001>

<llo_original>
// kernel: tpu_custom_call.1
$region0: #{tpu_custom_call.1}
  #allocation0 [shape = 'u32[]', space=smem, size = 0x4, offset = 0x4, fixed_abs, tag = 'smem constant byte address 0x4 - core index']
  #allocation1 [shape = 'u32[144,128]{1,0:T(1,128)}', space=vmem, size = 0x12000, scoped, tag = 'internal scratch']
  %s0 = inlined_call_operand.vmem [shape: f32[128,16], index: 0, kind: input, shape index: {}]
  %s1 = inlined_call_operand.vmem [shape: f32[128,64], index: 1, kind: output, shape index: {}]
  %s2 = sld [smem:[#allocation0]]
  $region14: #{tpu_custom_call.1} parent=0
    _
  %s4 = ssub.s32 1, %s2
  %s5 = scalar_select 0, %s4, %s2
  // Predicated region
  $region2: #{tpu_custom_call.1} parent=0 // pred_check
    _
  $region3: #{tpu_custom_call.1} parent=0 // pred_check_branch
    %7 = sbr.rel (0) target = $region5
  $region4: #{tpu_custom_call.1} parent=0 // pred_region
    _
  $region5: #{tpu_custom_call.1} parent=0 // pred_fallthru
    _
  %v9 = vlaneseq
  %v10 = vshrl.u32 %v9, 7
  %v11 = vadd.s32 %v10, 8
  %v12 = vlaneseq
  %v13 = vand.u32 %v12, 127
  %v14 = vmul.u32 %v10, 2
  %v15 = vmul.u32 %v11, 2
  %v16 = vsub.s32 %v13, %v14
  %v17 = vsub.s32 %v13, %v15
  %vm18 = vcmp.ge.s32.totalorder %v16, 0
  %vm19 = vcmp.ge.s32.totalorder %v17, 0
  %vm20 = vcmp.lt.s32.totalorder %v16, 2
  %vm21 = vcmp.lt.s32.totalorder %v17, 2
  %vm22 = vmand %vm18, %vm20
  %vm23 = vmand %vm19, %vm21
  %v24 = vsel %vm22, 1.0, 0.0
  %v25 = vsel %vm23, 1.0, 0.0
  %v26 = vpack.c.bf16 %v25, %v24
  %v27 = vld [vmem:[%s0] sm:$0xff]
  %v28 = vld [vmem:[%s0 + $0x8] sm:$0xff]
  %v29 = vld [vmem:[%s0 + $0x10] sm:$0xff]
  %v30 = vld [vmem:[%s0 + $0x18] sm:$0xff]
  %v31 = vld [vmem:[%s0 + $0x20] sm:$0xff]
  %v32 = vld [vmem:[%s0 + $0x28] sm:$0xff]
  %v33 = vld [vmem:[%s0 + $0x30] sm:$0xff]
  %v34 = vld [vmem:[%s0 + $0x38] sm:$0xff]
  %v35 = vld [vmem:[%s0 + $0x40] sm:$0xff]
  %v36 = vld [vmem:[%s0 + $0x48] sm:$0xff]
  %v37 = vld [vmem:[%s0 + $0x50] sm:$0xff]
  %v38 = vld [vmem:[%s0 + $0x58] sm:$0xff]
  %v39 = vld [vmem:[%s0 + $0x60] sm:$0xff]
  %v40 = vld [vmem:[%s0 + $0x68] sm:$0xff]
  %v41 = vld [vmem:[%s0 + $0x70] sm:$0xff]
  %v42 = vld [vmem:[%s0 + $0x78] sm:$0xff]
  %v43 = vpack.c.bf16 %v28, %v27
  %v44 = vpack.c.bf16 %v30, %v29
  %v45 = vpack.c.bf16 %v32, %v31
  %v46 = vpack.c.bf16 %v34, %v33
  %v47 = vpack.c.bf16 %v36, %v35
  %v48 = vpack.c.bf16 %v38, %v37
  %v49 = vpack.c.bf16 %v40, %v39
  %v50 = vpack.c.bf16 %v42, %v41
  %v51 = vunpack.c.l.bf16 %v43
  %v52 = vunpack.c.h.bf16 %v43
  %v53 = vunpack.c.l.bf16 %v44
  %v54 = vunpack.c.h.bf16 %v44
  %v55 = vunpack.c.l.bf16 %v45
  %v56 = vunpack.c.h.bf16 %v45
  %v57 = vunpack.c.l.bf16 %v46
  %v58 = vunpack.c.h.bf16 %v46
  %v59 = vunpack.c.l.bf16 %v47
  %v60 = vunpack.c.h.bf16 %v47
  %v61 = vunpack.c.l.bf16 %v48
  %v62 = vunpack.c.h.bf16 %v48
  %v63 = vunpack.c.l.bf16 %v49
  %v64 = vunpack.c.h.bf16 %v49
  %v65 = vunpack.c.l.bf16 %v50
  %v66 = vunpack.c.h.bf16 %v50
  %v67 = vsub.f32 %v27, %v51
  %v68 = vsub.f32 %v28, %v52
  %v69 = vsub.f32 %v29, %v53
  %v70 = vsub.f32 %v30, %v54
  %v71 = vsub.f32 %v31, %v55
  %v72 = vsub.f32 %v32, %v56
  %v73 = vsub.f32 %v33, %v57
  %v74 = vsub.f32 %v34, %v58
  %v75 = vsub.f32 %v35, %v59
  %v76 = vsub.f32 %v36, %v60
  %v77 = vsub.f32 %v37, %v61
  %v78 = vsub.f32 %v38, %v62
  %v79 = vsub.f32 %v39, %v63
  %v80 = vsub.f32 %v40, %v64
  %v81 = vsub.f32 %v41, %v65
  %v82 = vsub.f32 %v42, %v66
  %v83 = vpack.c.bf16 %v68, %v67
  %v84 = vpack.c.bf16 %v70, %v69
  %v85 = vpack.c.bf16 %v72, %v71
  %v86 = vpack.c.bf16 %v74, %v73
  %v87 = vpack.c.bf16 %v76, %v75
  %v88 = vpack.c.bf16 %v78, %v77
  %v89 = vpack.c.bf16 %v80, %v79
  %v90 = vpack.c.bf16 %v82, %v81
  %v91 = vunpack.c.l.bf16 %v83
  %v92 = vunpack.c.h.bf16 %v83
  %v93 = vunpack.c.l.bf16 %v84
  %v94 = vunpack.c.h.bf16 %v84
  %v95 = vunpack.c.l.bf16 %v85
  %v96 = vunpack.c.h.bf16 %v85
  %v97 = vunpack.c.l.bf16 %v86
  %v98 = vunpack.c.h.bf16 %v86
  %v99 = vunpack.c.l.bf16 %v87
  %v100 = vunpack.c.h.bf16 %v87
  %v101 = vunpack.c.l.bf16 %v88
  %v102 = vunpack.c.h.bf16 %v88
  %v103 = vunpack.c.l.bf16 %v89
  %v104 = vunpack.c.h.bf16 %v89
  %v105 = vunpack.c.l.bf16 %v90
  %v106 = vunpack.c.h.bf16 %v90
  %v107 = vsub.f32 %v67, %v91
  %v108 = vsub.f32 %v68, %v92
  %v109 = vsub.f32 %v69, %v93
  %v110 = vsub.f32 %v70, %v94
  %v111 = vsub.f32 %v71, %v95
  %v112 = vsub.f32 %v72, %v96
  %v113 = vsub.f32 %v73, %v97
  %v114 = vsub.f32 %v74, %v98
  %v115 = vsub.f32 %v75, %v99
  %v116 = vsub.f32 %v76, %v100
  %v117 = vsub.f32 %v77, %v101
  %v118 = vsub.f32 %v78, %v102
  %v119 = vsub.f32 %v79, %v103
  %v120 = vsub.f32 %v80, %v104
  %v121 = vsub.f32 %v81, %v105
  %v122 = vsub.f32 %v82, %v106
  %v123 = vpack.c.bf16 %v108, %v107
  %v124 = vpack.c.bf16 %v110, %v109
  %v125 = vpack.c.bf16 %v112, %v111
  %v126 = vpack.c.bf16 %v114, %v113
  %v127 = vpack.c.bf16 %v116, %v115
  %v128 = vpack.c.bf16 %v118, %v117
  %v129 = vpack.c.bf16 %v120, %v119
  %v130 = vpack.c.bf16 %v122, %v121
  %vm131 = vcmask 130048
  %v133 = vsel %vm131, %v83, 0
  %v136 = vsel %vm131, %v84, 0
  %v139 = vsel %vm131, %v85, 0
  %v142 = vsel %vm131, %v86, 0
  %v145 = vsel %vm131, %v87, 0
  %v148 = vsel %vm131, %v88, 0
  %v151 = vsel %vm131, %v89, 0
  %v154 = vsel %vm131, %v90, 0
  %156 = vmatprep.subr.bf16.mxu0 0
  %157 = vmatpush1.bf16.msra.mxu0 %v26
  %158 = vmatprep.subr.bf16.mxu0 0
  %159 = vmatpush1.bf16.msra.mxu0 0
  %160 = vmatprep.subr.bf16.mxu0 0
  %161 = vmatpush1.bf16.msra.mxu0 0
  %162 = vmatprep.subr.bf16.mxu0 0
  %163 = vmatpush1.bf16.msra.mxu0 0
  %164 = vmatprep.subr.bf16.mxu0 0
  %165 = vmatpush1.bf16.msra.mxu0 0
  %166 = vmatprep.subr.bf16.mxu0 0
  %167 = vmatpush1.bf16.msra.mxu0 0
  %168 = vmatprep.subr.bf16.mxu0 0
  %169 = vmatpush1.bf16.msra.mxu0 0
  %170 = vmatprep.subr.bf16.mxu0 0
  %171 = vmatpush1.bf16.msra.mxu0 0
  %172 = vmatprep.subr.bf16.mxu0 0
  %173 = vmatpush1.bf16.msra.mxu0 0
  %174 = vmatprep.subr.bf16.mxu0 0
  %175 = vmatpush1.bf16.msra.mxu0 0
  %176 = vmatprep.subr.bf16.mxu0 0
  %177 = vmatpush1.bf16.msra.mxu0 0
  %178 = vmatprep.subr.bf16.mxu0 0
  %179 = vmatpush1.bf16.msra.mxu0 0
  %180 = vmatprep.subr.bf16.mxu0 0
  %181 = vmatpush1.bf16.msra.mxu0 0
  %182 = vmatprep.subr.bf16.mxu0 0
  %183 = vmatpush1.bf16.msra.mxu0 0
  %184 = vmatprep.subr.bf16.mxu0 0
  %185 = vmatpush1.bf16.msra.mxu0 0
  %186 = vmatprep.subr.bf16.mxu0 0
  %187 = vmatpush1.bf16.msra.mxu0 0
  %188 = vmatprep.mubr.bf16.mxu0 0
  %189 = vmatmul.mubr.bf16.gmra.mrb[0].mxu0 %v133
  %v190 = vpop.f32.mrb[0].mxu0
  %v191 = vadd.f32 0.0, %v190
  %v192 = vpop.f32.mrb[0].mxu0
  %v193 = vpop.f32.mrb[0].mxu0
  %v194 = vadd.f32 0.0, %v193
  %v195 = vpop.f32.mrb[0].mxu0
  %196 = vmatprep.mubr.bf16.mxu0 0
  %197 = vmatmul.mubr.bf16.gmra.mrb[0].mxu0 %v136
  %v198 = vpop.f32.mrb[0].mxu0
  %v199 = vadd.f32 0.0, %v198
  %v200 = vpop.f32.mrb[0].mxu0
  %v201 = vpop.f32.mrb[0].mxu0
  %v202 = vadd.f32 0.0, %v201
  %v203 = vpop.f32.mrb[0].mxu0
  %204 = vmatprep.mubr.bf16.mxu0 0
  %205 = vmatmul.mubr.bf16.gmra.mrb[0].mxu0 %v139
  %v206 = vpop.f32.mrb[0].mxu0
  %v207 = vadd.f32 0.0, %v206
  %v208 = vpop.f32.mrb[0].mxu0
  %v209 = vpop.f32.mrb[0].mxu0
  %v210 = vadd.f32 0.0, %v209
  %v211 = vpop.f32.mrb[0].mxu0
  %212 = vmatprep.mubr.bf16.mxu0 0
  %213 = vmatmul.mubr.bf16.gmra.mrb[0].mxu0 %v142
  %v214 = vpop.f32.mrb[0].mxu0
  %v215 = vadd.f32 0.0, %v214
  %v216 = vpop.f32.mrb[0].mxu0
  %v217 = vpop.f32.mrb[0].mxu0
  %v218 = vadd.f32 0.0, %v217
  %v219 = vpop.f32.mrb[0].mxu0
  %220 = vmatprep.mubr.bf16.mxu0 0
  %221 = vmatmul.mubr.bf16.gmra.mrb[0].mxu0 %v145
  %v222 = vpop.f32.mrb[0].mxu0
  %v223 = vadd.f32 0.0, %v222
  %v224 = vpop.f32.mrb[0].mxu0
  %v225 = vpop.f32.mrb[0].mxu0
  %v226 = vadd.f32 0.0, %v225
  %v227 = vpop.f32.mrb[0].mxu0
  %228 = vmatprep.mubr.bf16.mxu0 0
  %229 = vmatmul.mubr.bf16.gmra.mrb[0].mxu0 %v148
  %v230 = vpop.f32.mrb[0].mxu0
  %v231 = vadd.f32 0.0, %v230
  %v232 = vpop.f32.mrb[0].mxu0
  %v233 = vpop.f32.mrb[0].mxu0
  %v234 = vadd.f32 0.0, %v233
  %v235 = vpop.f32.mrb[0].mxu0
  %236 = vmatprep.mubr.bf16.mxu0 0
  %237 = vmatmul.mubr.bf16.gmra.mrb[0].mxu0 %v151
  %v238 = vpop.f32.mrb[0].mxu0
  %v239 = vadd.f32 0.0, %v238
  %v240 = vpop.f32.mrb[0].mxu0
  %v241 = vpop.f32.mrb[0].mxu0
  %v242 = vadd.f32 0.0, %v241
  %v243 = vpop.f32.mrb[0].mxu0
  %244 = vmatprep.mubr.bf16.mxu0 0
  %245 = vmatmul.mubr.bf16.gmra.mrb[0].mxu0 %v154
  %v246 = vpop.f32.mrb[0].mxu0
  %v247 = vadd.f32 0.0, %v246
  %v248 = vpop.f32.mrb[0].mxu0
  %v249 = vpop.f32.mrb[0].mxu0
  %v250 = vadd.f32 0.0, %v249
  %v251 = vpop.f32.mrb[0].mxu0
  %252 = vdwg.mxu0
  %v254 = vsel %vm131, %v43, 0
  %v257 = vsel %vm131, %v44, 0
  %v260 = vsel %vm131, %v45, 0
  %v263 = vsel %vm131, %v46, 0
  %v266 = vsel %vm131, %v47, 0
  %v269 = vsel %vm131, %v48, 0
  %v272 = vsel %vm131, %v49, 0
  %v275 = vsel %vm131, %v50, 0
  %277 = vmatprep.subr.bf16.mxu0 0
  %278 = vmatpush1.bf16.msra.mxu0 %v26
  %279 = vmatprep.subr.bf16.mxu0 0
  %280 = vmatpush1.bf16.msra.mxu0 0
  %281 = vmatprep.subr.bf16.mxu0 0
  %282 = vmatpush1.bf16.msra.mxu0 0
  %283 = vmatprep.subr.bf16.mxu0 0
  %284 = vmatpush1.bf16.msra.mxu0 0
  %285 = vmatprep.subr.bf16.mxu0 0
  %286 = vmatpush1.bf16.msra.mxu0 0
  %287 = vmatprep.subr.bf16.mxu0 0
  %288 = vmatpush1.bf16.msra.mxu0 0
  %289 = vmatprep.subr.bf16.mxu0 0
  %290 = vmatpush1.bf16.msra.mxu0 0
  %291 = vmatprep.subr.bf16.mxu0 0
  %292 = vmatpush1.bf16.msra.mxu0 0
  %293 = vmatprep.subr.bf16.mxu0 0
  %294 = vmatpush1.bf16.msra.mxu0 0
  %295 = vmatprep.subr.bf16.mxu0 0
  %296 = vmatpush1.bf16.msra.mxu0 0
  %297 = vmatprep.subr.bf16.mxu0 0
  %298 = vmatpush1.bf16.msra.mxu0 0
  %299 = vmatprep.subr.bf16.mxu0 0
  %300 = vmatpush1.bf16.msra.mxu0 0
  %301 = vmatprep.subr.bf16.mxu0 0
  %302 = vmatpush1.bf16.msra.mxu0 0
  %303 = vmatprep.subr.bf16.mxu0 0
  %304 = vmatpush1.bf16.msra.mxu0 0
  %305 = vmatprep.subr.bf16.mxu0 0
  %306 = vmatpush1.bf16.msra.mxu0 0
  %307 = vmatprep.subr.bf16.mxu0 0
  %308 = vmatpush1.bf16.msra.mxu0 0
  %309 = vmatprep.mubr.bf16.mxu0 0
  %310 = vmatmul.mubr.bf16.gmra.mrb[0].mxu0 %v254
  %v311 = vpop.f32.mrb[0].mxu0
  %v312 = vadd.f32 %v191, %v311
  %v313 = vpop.f32.mrb[0].mxu0
  %v314 = vpop.f32.mrb[0].mxu0
  %v315 = vadd.f32 %v194, %v314
  %v316 = vpop.f32.mrb[0].mxu0
  %317 = vmatprep.mubr.bf16.mxu0 0
  %318 = vmatmul.mubr.bf16.gmra.mrb[0].mxu0 %v257
  %v319 = vpop.f32.mrb[0].mxu0
  %v320 = vadd.f32 %v199, %v319
  %v321 = vpop.f32.mrb[0].mxu0
  %v322 = vpop.f32.mrb[0].mxu0
  %v323 = vadd.f32 %v202, %v322
  %v324 = vpop.f32.mrb[0].mxu0
  %325 = vmatprep.mubr.bf16.mxu0 0
  %326 = vmatmul.mubr.bf16.gmra.mrb[0].mxu0 %v260
  %v327 = vpop.f32.mrb[0].mxu0
  %v328 = vadd.f32 %v207, %v327
  %v329 = vpop.f32.mrb[0].mxu0
  %v330 = vpop.f32.mrb[0].mxu0
  %v331 = vadd.f32 %v210, %v330
  %v332 = vpop.f32.mrb[0].mxu0
  %333 = vmatprep.mubr.bf16.mxu0 0
  %334 = vmatmul.mubr.bf16.gmra.mrb[0].mxu0 %v263
  %v335 = vpop.f32.mrb[0].mxu0
  %v336 = vadd.f32 %v215, %v335
  %v337 = vpop.f32.mrb[0].mxu0
  %v338 = vpop.f32.mrb[0].mxu0
  %v339 = vadd.f32 %v218, %v338
  %v340 = vpop.f32.mrb[0].mxu0
  %341 = vmatprep.mubr.bf16.mxu0 0
  %342 = vmatmul.mubr.bf16.gmra.mrb[0].mxu0 %v266
  %v343 = vpop.f32.mrb[0].mxu0
  %v344 = vadd.f32 %v223, %v343
  %v345 = vpop.f32.mrb[0].mxu0
  %v346 = vpop.f32.mrb[0].mxu0
  %v347 = vadd.f32 %v226, %v346
  %v348 = vpop.f32.mrb[0].mxu0
  %349 = vmatprep.mubr.bf16.mxu0 0
  %350 = vmatmul.mubr.bf16.gmra.mrb[0].mxu0 %v269
  %v351 = vpop.f32.mrb[0].mxu0
  %v352 = vadd.f32 %v231, %v351
  %v353 = vpop.f32.mrb[0].mxu0
  %v354 = vpop.f32.mrb[0].mxu0
  %v355 = vadd.f32 %v234, %v354
  %v356 = vpop.f32.mrb[0].mxu0
  %357 = vmatprep.mubr.bf16.mxu0 0
  %358 = vmatmul.mubr.bf16.gmra.mrb[0].mxu0 %v272
  %v359 = vpop.f32.mrb[0].mxu0
  %v360 = vadd.f32 %v239, %v359
  %v361 = vpop.f32.mrb[0].mxu0
  %v362 = vpop.f32.mrb[0].mxu0
  %v363 = vadd.f32 %v242, %v362
  %v364 = vpop.f32.mrb[0].mxu0
  %365 = vmatprep.mubr.bf16.mxu0 0
  %366 = vmatmul.mubr.bf16.gmra.mrb[0].mxu0 %v275
  %v367 = vpop.f32.mrb[0].mxu0
  %v368 = vadd.f32 %v247, %v367
  %v369 = vpop.f32.mrb[0].mxu0
  %v370 = vpop.f32.mrb[0].mxu0
  %v371 = vadd.f32 %v250, %v370
  %v372 = vpop.f32.mrb[0].mxu0
  %373 = vdwg.mxu0
  %v375 = vsel %vm131, %v123, 0
  %v378 = vsel %vm131, %v124, 0
  %v381 = vsel %vm131, %v125, 0
  %v384 = vsel %vm131, %v126, 0
  %v387 = vsel %vm131, %v127, 0
  %v390 = vsel %vm131, %v128, 0
  %v393 = vsel %vm131, %v129, 0
  %v396 = vsel %vm131, %v130, 0
  %398 = vmatprep.subr.bf16.mxu0 0
  %399 = vmatpush1.bf16.msra.mxu0 %v26
  %400 = vmatprep.subr.bf16.mxu0 0
  %401 = vmatpush1.bf16.msra.mxu0 0
  %402 = vmatprep.subr.bf16.mxu0 0
  %403 = vmatpush1.bf16.msra.mxu0 0
  %404 = vmatprep.subr.bf16.mxu0 0
  %405 = vmatpush1.bf16.msra.mxu0 0
  %406 = vmatprep.subr.bf16.mxu0 0
  %407 = vmatpush1.bf16.msra.mxu0 0
  %408 = vmatprep.subr.bf16.mxu0 0
  %409 = vmatpush1.bf16.msra.mxu0 0
  %410 = vmatprep.subr.bf16.mxu0 0
  %411 = vmatpush1.bf16.msra.mxu0 0
  %412 = vmatprep.subr.bf16.mxu0 0
  %413 = vmatpush1.bf16.msra.mxu0 0
  %414 = vmatprep.subr.bf16.mxu0 0
  %415 = vmatpush1.bf16.msra.mxu0 0
  %416 = vmatprep.subr.bf16.mxu0 0
  %417 = vmatpush1.bf16.msra.mxu0 0
  %418 = vmatprep.subr.bf16.mxu0 0
  %419 = vmatpush1.bf16.msra.mxu0 0
  %420 = vmatprep.subr.bf16.mxu0 0
  %421 = vmatpush1.bf16.msra.mxu0 0
  %422 = vmatprep.subr.bf16.mxu0 0
  %423 = vmatpush1.bf16.msra.mxu0 0
  %424 = vmatprep.subr.bf16.mxu0 0
  %425 = vmatpush1.bf16.msra.mxu0 0
  %426 = vmatprep.subr.bf16.mxu0 0
  %427 = vmatpush1.bf16.msra.mxu0 0
  %428 = vmatprep.subr.bf16.mxu0 0
  %429 = vmatpush1.bf16.msra.mxu0 0
  %430 = vmatprep.mubr.bf16.mxu0 0
  %431 = vmatmul.mubr.bf16.gmra.mrb[0].mxu0 %v375
  %v432 = vpop.f32.mrb[0].mxu0
  %v433 = vadd.f32 0.0, %v432
  %v434 = vpop.f32.mrb[0].mxu0
  %v435 = vpop.f32.mrb[0].mxu0
  %v436 = vadd.f32 0.0, %v435
  %v437 = vpop.f32.mrb[0].mxu0
  %438 = vmatprep.mubr.bf16.mxu0 0
  %439 = vmatmul.mubr.bf16.gmra.mrb[0].mxu0 %v378
  %v440 = vpop.f32.mrb[0].mxu0
  %v441 = vadd.f32 0.0, %v440
  %v442 = vpop.f32.mrb[0].mxu0
  %v443 = vpop.f32.mrb[0].mxu0
  %v444 = vadd.f32 0.0, %v443
  %v445 = vpop.f32.mrb[0].mxu0
  %446 = vmatprep.mubr.bf16.mxu0 0
  %447 = vmatmul.mubr.bf16.gmra.mrb[0].mxu0 %v381
  %v448 = vpop.f32.mrb[0].mxu0
  %v449 = vadd.f32 0.0, %v448
  %v450 = vpop.f32.mrb[0].mxu0
  %v451 = vpop.f32.mrb[0].mxu0
  %v452 = vadd.f32 0.0, %v451
  %v453 = vpop.f32.mrb[0].mxu0
  %454 = vmatprep.mubr.bf16.mxu0 0
  %455 = vmatmul.mubr.bf16.gmra.mrb[0].mxu0 %v384
  %v456 = vpop.f32.mrb[0].mxu0
  %v457 = vadd.f32 0.0, %v456
  %v458 = vpop.f32.mrb[0].mxu0
  %v459 = vpop.f32.mrb[0].mxu0
  %v460 = vadd.f32 0.0, %v459
  %v461 = vpop.f32.mrb[0].mxu0
  %462 = vmatprep.mubr.bf16.mxu0 0
  %463 = vmatmul.mubr.bf16.gmra.mrb[0].mxu0 %v387
  %v464 = vpop.f32.mrb[0].mxu0
  %v465 = vadd.f32 0.0, %v464
  %v466 = vpop.f32.mrb[0].mxu0
  %v467 = vpop.f32.mrb[0].mxu0
  %v468 = vadd.f32 0.0, %v467
  %v469 = vpop.f32.mrb[0].mxu0
  %470 = vmatprep.mubr.bf16.mxu0 0
  %471 = vmatmul.mubr.bf16.gmra.mrb[0].mxu0 %v390
  %v472 = vpop.f32.mrb[0].mxu0
  %v473 = vadd.f32 0.0, %v472
  %v474 = vpop.f32.mrb[0].mxu0
  %v475 = vpop.f32.mrb[0].mxu0
  %v476 = vadd.f32 0.0, %v475
  %v477 = vpop.f32.mrb[0].mxu0
  %478 = vmatprep.mubr.bf16.mxu0 0
  %479 = vmatmul.mubr.bf16.gmra.mrb[0].mxu0 %v393
  %v480 = vpop.f32.mrb[0].mxu0
  %v481 = vadd.f32 0.0, %v480
  %v482 = vpop.f32.mrb[0].mxu0
  %v483 = vpop.f32.mrb[0].mxu0
  %v484 = vadd.f32 0.0, %v483
  %v485 = vpop.f32.mrb[0].mxu0
  %486 = vmatprep.mubr.bf16.mxu0 0
  %487 = vmatmul.mubr.bf16.gmra.mrb[0].mxu0 %v396
  %v488 = vpop.f32.mrb[0].mxu0
  %v489 = vadd.f32 0.0, %v488
  %v490 = vpop.f32.mrb[0].mxu0
  %v491 = vpop.f32.mrb[0].mxu0
  %v492 = vadd.f32 0.0, %v491
  %v493 = vpop.f32.mrb[0].mxu0
  %494 = vdwg.mxu0
  %v495 = vadd.f32 %v312, %v433
  %v496 = vadd.f32 %v315, %v436
  %v497 = vadd.f32 %v320, %v441
  %v498 = vadd.f32 %v323, %v444
  %v499 = vadd.f32 %v328, %v449
  %v500 = vadd.f32 %v331, %v452
  %v501 = vadd.f32 %v336, %v457
  %v502 = vadd.f32 %v339, %v460
  %v503 = vadd.f32 %v344, %v465
  %v504 = vadd.f32 %v347, %v468
  %v505 = vadd.f32 %v352, %v473
  %v506 = vadd.f32 %v355, %v476
  %v507 = vadd.f32 %v360, %v481
  %v508 = vadd.f32 %v363, %v484
  %v509 = vadd.f32 %v368, %v489
  %v510 = vadd.f32 %v371, %v492
  %vm511 = vcmask 261120
  %512 = vst.msk [vmem:[%s1] sm:$0xff] %vm511, %v495
  %513 = vst.msk [vmem:[%s1 + $0x8] sm:$0xff] %vm511, %v496
  %514 = vst.msk [vmem:[%s1 + $0x10] sm:$0xff] %vm511, %v497
  %515 = vst.msk [vmem:[%s1 + $0x18] sm:$0xff] %vm511, %v498
  %516 = vst.msk [vmem:[%s1 + $0x20] sm:$0xff] %vm511, %v499
  %517 = vst.msk [vmem:[%s1 + $0x28] sm:$0xff] %vm511, %v500
  %518 = vst.msk [vmem:[%s1 + $0x30] sm:$0xff] %vm511, %v501
  %519 = vst.msk [vmem:[%s1 + $0x38] sm:$0xff] %vm511, %v502
  %520 = vst.msk [vmem:[%s1 + $0x40] sm:$0xff] %vm511, %v503
  %521 = vst.msk [vmem:[%s1 + $0x48] sm:$0xff] %vm511, %v504
  %522 = vst.msk [vmem:[%s1 + $0x50] sm:$0xff] %vm511, %v505
  %523 = vst.msk [vmem:[%s1 + $0x58] sm:$0xff] %vm511, %v506
  %524 = vst.msk [vmem:[%s1 + $0x60] sm:$0xff] %vm511, %v507
  %525 = vst.msk [vmem:[%s1 + $0x68] sm:$0xff] %vm511, %v508
  %526 = vst.msk [vmem:[%s1 + $0x70] sm:$0xff] %vm511, %v509
  %527 = vst.msk [vmem:[%s1 + $0x78] sm:$0xff] %vm511, %v510
  %544 = vrot.lane.b32.xlu0 %v495, 32
  %v545 = vpop.permute.xlu0 %544
  %546 = vrot.lane.b32.xlu0 %v496, 32
  %v547 = vpop.permute.xlu0 %546
  %548 = vrot.lane.b32.xlu0 %v497, 32
  %v549 = vpop.permute.xlu0 %548
  %550 = vrot.lane.b32.xlu0 %v498, 32
  %v551 = vpop.permute.xlu0 %550
  %552 = vrot.lane.b32.xlu0 %v499, 32
  %v553 = vpop.permute.xlu0 %552
  %554 = vrot.lane.b32.xlu0 %v500, 32
  %v555 = vpop.permute.xlu0 %554
  %556 = vrot.lane.b32.xlu0 %v501, 32
  %v557 = vpop.permute.xlu0 %556
  %558 = vrot.lane.b32.xlu0 %v502, 32
  %v559 = vpop.permute.xlu0 %558
  %560 = vrot.lane.b32.xlu0 %v503, 32
  %v561 = vpop.permute.xlu0 %560
  %562 = vrot.lane.b32.xlu0 %v504, 32
  %v563 = vpop.permute.xlu0 %562
  %564 = vrot.lane.b32.xlu0 %v505, 32
  %v565 = vpop.permute.xlu0 %564
  %566 = vrot.lane.b32.xlu0 %v506, 32
  %v567 = vpop.permute.xlu0 %566
  %568 = vrot.lane.b32.xlu0 %v507, 32
  %v569 = vpop.permute.xlu0 %568
  %570 = vrot.lane.b32.xlu0 %v508, 32
  %v571 = vpop.permute.xlu0 %570
  %572 = vrot.lane.b32.xlu0 %v509, 32
  %v573 = vpop.permute.xlu0 %572
  %574 = vrot.lane.b32.xlu0 %v510, 32
  %v575 = vpop.permute.xlu0 %574
  %vm592 = vcmask 523520
  %593 = vst.msk [vmem:[%s1] sm:$0xff] %vm592, %v545
  %594 = vst.msk [vmem:[%s1 + $0x8] sm:$0xff] %vm592, %v547
  %595 = vst.msk [vmem:[%s1 + $0x10] sm:$0xff] %vm592, %v549
  %596 = vst.msk [vmem:[%s1 + $0x18] sm:$0xff] %vm592, %v551
  %597 = vst.msk [vmem:[%s1 + $0x20] sm:$0xff] %vm592, %v553
  %598 = vst.msk [vmem:[%s1 + $0x28] sm:$0xff] %vm592, %v555
  %599 = vst.msk [vmem:[%s1 + $0x30] sm:$0xff] %vm592, %v557
  %600 = vst.msk [vmem:[%s1 + $0x38] sm:$0xff] %vm592, %v559
  %601 = vst.msk [vmem:[%s1 + $0x40] sm:$0xff] %vm592, %v561
  %602 = vst.msk [vmem:[%s1 + $0x48] sm:$0xff] %vm592, %v563
  %603 = vst.msk [vmem:[%s1 + $0x50] sm:$0xff] %vm592, %v565
  %604 = vst.msk [vmem:[%s1 + $0x58] sm:$0xff] %vm592, %v567
  %605 = vst.msk [vmem:[%s1 + $0x60] sm:$0xff] %vm592, %v569
  %606 = vst.msk [vmem:[%s1 + $0x68] sm:$0xff] %vm592, %v571
  %607 = vst.msk [vmem:[%s1 + $0x70] sm:$0xff] %vm592, %v573
  %608 = vst.msk [vmem:[%s1 + $0x78] sm:$0xff] %vm592, %v575
  // Predicated region
  $region6: #{tpu_custom_call.1} parent=0 // pred_check
    _
  $region7: #{tpu_custom_call.1} parent=0 // pred_check_branch
    %610 = sbr.rel (0) target = $region9
  $region8: #{tpu_custom_call.1} parent=0 // pred_region
    _
  $region9: #{tpu_custom_call.1} parent=0 // pred_fallthru
    _
  // Predicated region
  $region10: #{tpu_custom_call.1} parent=0 // pred_check
    _
  $region11: #{tpu_custom_call.1} parent=0 // pred_check_branch
    %612 = sbr.rel (0) target = $region13
  $region12: #{tpu_custom_call.1} parent=0 // pred_region
    _
  $region13: #{tpu_custom_call.1} parent=0 // pred_fallthru
    _

</llo_original>
